<compile_context>
chip_gen: v7x
topology: tpu7x:2x2x1
jax: 0.10.0
libtpu: 0.0.40
codegen_flags: <defaults>
</compile_context>

<pallas_src>
import functools

import jax
import jax.numpy as jnp
from jax import lax
from jax.experimental import pallas as pl
from jax.experimental.pallas import tpu as pltpu

HID1, HID2, HID3 = 100, 100, 40   # nn.Linear(input,100), (100,100), (100,40), (40,out)
_MAX_BATCH_TILE = 2048            # per-tile footprint ~2-3 MiB << scoped VMEM


def _round_up(x, m):
    return (x + m - 1) // m * m


def _pad2d(a, rows, cols):
    return jnp.pad(a, ((0, rows - a.shape[0]), (0, cols - a.shape[1])))


def mlp_kernel(x_ref, w1_ref, b1_ref, w2_ref, b2_ref, w3_ref, b3_ref,
               w4t_ref, b4t_ref, o_ref):
    # Layer 1 on the MXU: (TB, d_in) x (d_in, 128).  x is lane-dense in HBM;
    # Mosaic pads the tiny K contraction internally.  bf16 operands, f32 acc.
    x = x_ref[...].astype(jnp.bfloat16)
    h = jnp.dot(x, w1_ref[...], preferred_element_type=jnp.float32)
    h = jnp.maximum(h + b1_ref[...], 0.0).astype(jnp.bfloat16)

    # Layers 2-3: bf16 x bf16 -> f32 MXU; bias/ReLU in f32 on the VPU, then
    # immediately packed back to bf16 so inter-layer activations stay bf16.
    h = jnp.dot(h, w2_ref[...], preferred_element_type=jnp.float32)
    h = jnp.maximum(h + b2_ref[...], 0.0).astype(jnp.bfloat16)
    h = jnp.dot(h, w3_ref[...], preferred_element_type=jnp.float32)
    h = jnp.maximum(h + b3_ref[...], 0.0)            # f32 into the f32 head

    # Output head (40 -> d_out) in f32, computed transposed so the store is
    # lane-dense:  out_t[j, b] = sum_k w4t[j, k] * h[b, k]   (A @ B^T form).
    out_t = lax.dot_general(
        w4t_ref[...], h,
        dimension_numbers=(((1,), (1,)), ((), ())),
        preferred_element_type=jnp.float32)           # (dop, TB)
    dout = o_ref.shape[0]
    o_ref[...] = (out_t[:dout, :] + b4t_ref[:dout, :]).astype(o_ref.dtype)


def prepare_params(params):
    """Pad + cast the weights once, outside the per-call path.

    Weights are stored [in, out] (transposed vs PyTorch nn.Linear.weight).
    Hidden dims are zero-padded to 128 lanes (padded rows/cols are inert
    through matmul + ReLU).  w1/w2/w3 -> bf16 (MXU-native); the output head
    (w4, stored pre-transposed as [out, in]) and all biases stay f32.
    """
    w1, b1 = params["l1"]
    w2, b2 = params["l2"]
    w3, b3 = params["l3"]
    w4, b4 = params["l4"]
    d_in, d_out = w1.shape[0], w4.shape[1]

    h1p, h2p, h3p = (_round_up(h, 128) for h in (HID1, HID2, HID3))
    dop = max(_round_up(d_out, 8), 8)                 # sublane pad of the head

    w1p = _pad2d(w1, d_in, h1p).astype(jnp.bfloat16)
    w2p = _pad2d(w2, h1p, h2p).astype(jnp.bfloat16)
    w3p = _pad2d(w3, h2p, h3p).astype(jnp.bfloat16)
    w4t = _pad2d(w4.T.astype(jnp.float32), dop, h3p)  # (dop, h3p), f32 head
    b1p = _pad2d(b1.astype(jnp.float32)[None, :], 1, h1p)
    b2p = _pad2d(b2.astype(jnp.float32)[None, :], 1, h2p)
    b3p = _pad2d(b3.astype(jnp.float32)[None, :], 1, h3p)
    b4t = _pad2d(b4.astype(jnp.float32)[:, None], dop, 1)
    return (w1p, b1p, w2p, b2p, w3p, b3p, w4t, b4t)


def _batch_tile(batch):
    """Batch tile: multiple of 128 (lane-dense transposed output)."""
    b128 = _round_up(batch, 128)
    if b128 <= 256:
        return b128                                   # tiny batch: one tile
    # Split non-tiny batches into >=2 tiles so both v7x TensorCores get work;
    # cap the tile so very large batches still pipeline DMA vs compute.
    # TODO(synk): try pltpu.CORE_PARALLEL on the batch axis for v7x.
    return min(_round_up(pl.cdiv(batch, 2), 128), _MAX_BATCH_TILE)


@functools.partial(jax.jit, static_argnames=("d_out",))
def neural_net_forward(x, prepared, *, d_out):
    """x: [batch, input_size] f32; prepared: output of prepare_params."""
    w1p, b1p, w2p, b2p, w3p, b3p, w4t, b4t = prepared
    batch, d_in = x.shape

    tb = _batch_tile(batch)
    bp = _round_up(batch, tb)
    xp = x.astype(jnp.float32)
    if bp != batch:
        xp = jnp.pad(xp, ((0, bp - batch), (0, 0)))   # row pad only, lane-dense

    resident = lambda a: pl.BlockSpec(a.shape, lambda i: (0, 0))

    out_t = pl.pallas_call(
        mlp_kernel,
        out_shape=jax.ShapeDtypeStruct((d_out, bp), jnp.float32),
        grid=(bp // tb,),
        in_specs=[
            pl.BlockSpec((tb, d_in), lambda i: (i, 0)),
            resident(w1p), resident(b1p),
            resident(w2p), resident(b2p),
            resident(w3p), resident(b3p),
            resident(w4t), resident(b4t),
        ],
        out_specs=pl.BlockSpec((d_out, tb), lambda i: (0, i)),
        compiler_params=pltpu.CompilerParams(
            dimension_semantics=("parallel",)),
    )(xp, w1p, b1p, w2p, b2p, w3p, b3p, w4t, b4t)

    # (d_out, bp) -> (batch, d_out); for d_out == 1 the transpose is free.
    return out_t[:, :batch].T


def init_params(key, input_size, output_size):
    """Deterministic init mimicking nn.Linear's U(-1/sqrt(fan_in), 1/sqrt(fan_in))."""
    dims = [(input_size, HID1), (HID1, HID2), (HID2, HID3), (HID3, output_size)]
    params = {}
    for i, (fan_in, fan_out) in enumerate(dims, start=1):
        key, kw, kb = jax.random.split(key, 3)
        bound = 1.0 / jnp.sqrt(fan_in)
        w = jax.random.uniform(kw, (fan_in, fan_out), jnp.float32, -bound, bound)
        b = jax.random.uniform(kb, (fan_out,), jnp.float32, -bound, bound)
        params[f"l{i}"] = (w, b)
    return params


def reference_forward(x, params):
    """Pure-f32 reference matching the PyTorch module semantics."""
    h = x
    for name in ["l1", "l2", "l3"]:
        w, b = params[name]
        h = jnp.maximum(h @ w + b, 0.0)
    w, b = params["l4"]
    return h @ w + b


if __name__ == "__main__":
    key = jax.random.PRNGKey(0)
    input_size, output_size, batch = 8, 1, 4

    k_x, k_p, k_x2 = jax.random.split(key, 3)
    params = init_params(k_p, input_size, output_size)
    prepared = prepare_params(params)

    # Small single-tile check.
    x = jax.random.normal(k_x, (batch, input_size), jnp.float32)
    out = neural_net_forward(x, prepared, d_out=output_size)
    out = jax.block_until_ready(out)
    ref = reference_forward(x, params)
    assert out.shape == (batch, output_size), out.shape
    # bf16 hidden layers (f32 accumulation, f32 output head) => ~1e-3-level
    # deviation from the pure-f32 reference.
    assert jnp.allclose(out, ref, atol=2e-2, rtol=2e-2), (out, ref)

    # Multi-tile (grid=2) + ragged-batch check.
    batch2 = 300
    x2 = jax.random.normal(k_x2, (batch2, input_size), jnp.float32)
    out2 = jax.block_until_ready(neural_net_forward(x2, prepared, d_out=output_size))
    ref2 = reference_forward(x2, params)
    assert out2.shape == (batch2, output_size), out2.shape
    assert jnp.allclose(out2, ref2, atol=2e-2, rtol=2e-2)

    print("KERNEL_OK")
</pallas_src>

<mosaic_0001>
module attributes {stable_mosaic.version = 11 : i64} {
  func.func @mlp_kernel(%arg0: i32, %arg1: memref<128x8xf32, #tpu.memory_space<vmem>>, %arg2: memref<8x128xbf16, #tpu.memory_space<vmem>>, %arg3: memref<1x128xf32, #tpu.memory_space<vmem>>, %arg4: memref<128x128xbf16, #tpu.memory_space<vmem>>, %arg5: memref<1x128xf32, #tpu.memory_space<vmem>>, %arg6: memref<128x128xbf16, #tpu.memory_space<vmem>>, %arg7: memref<1x128xf32, #tpu.memory_space<vmem>>, %arg8: memref<8x128xf32, #tpu.memory_space<vmem>>, %arg9: memref<8x1xf32, #tpu.memory_space<vmem>>, %arg10: memref<1x128xf32, #tpu.memory_space<vmem>>) attributes {dimension_semantics = [#tpu.dimension_semantics<parallel>], iteration_bounds = array<i64: 1>, scalar_prefetch = 0 : i64, scratch_operands = 0 : i64, tpu.core_type = #tpu.core_type<tc>, window_params = [{transform_indices = @transform_0, window_bounds = array<i64: 128, 8>}, {pipeline_mode = #tpu.pipeline_mode<synchronous>, transform_indices = @transform_1, window_bounds = array<i64: 8, 128>}, {pipeline_mode = #tpu.pipeline_mode<synchronous>, transform_indices = @transform_2, window_bounds = array<i64: 1, 128>}, {pipeline_mode = #tpu.pipeline_mode<synchronous>, transform_indices = @transform_3, window_bounds = array<i64: 128, 128>}, {pipeline_mode = #tpu.pipeline_mode<synchronous>, transform_indices = @transform_4, window_bounds = array<i64: 1, 128>}, {pipeline_mode = #tpu.pipeline_mode<synchronous>, transform_indices = @transform_5, window_bounds = array<i64: 128, 128>}, {pipeline_mode = #tpu.pipeline_mode<synchronous>, transform_indices = @transform_6, window_bounds = array<i64: 1, 128>}, {pipeline_mode = #tpu.pipeline_mode<synchronous>, transform_indices = @transform_7, window_bounds = array<i64: 8, 128>}, {pipeline_mode = #tpu.pipeline_mode<synchronous>, transform_indices = @transform_8, window_bounds = array<i64: 8, 1>}, {transform_indices = @transform_9, window_bounds = array<i64: 1, 128>}]} {
    %c0 = arith.constant 0 : index
    %c0_0 = arith.constant 0 : index
    %0 = vector.load %arg1[%c0, %c0_0] : memref<128x8xf32, #tpu.memory_space<vmem>>, vector<128x8xf32>
    %1 = arith.truncf %0 : vector<128x8xf32> to vector<128x8xbf16>
    %c0_1 = arith.constant 0 : index
    %c0_2 = arith.constant 0 : index
    %2 = vector.load %arg2[%c0_1, %c0_2] : memref<8x128xbf16, #tpu.memory_space<vmem>>, vector<8x128xbf16>
    %cst = arith.constant dense<0.000000e+00> : vector<128x128xf32>
    %3 = tpu.matmul %1, %2, %cst {dimension_numbers = #tpu.dot_dimension_numbers<[1], [0], [0], [1], [0, 0, 1, 1], [], []>} : vector<128x8xbf16>, vector<8x128xbf16>, vector<128x128xf32> -> vector<128x128xf32>
    %c0_3 = arith.constant 0 : index
    %c0_4 = arith.constant 0 : index
    %4 = vector.load %arg3[%c0_3, %c0_4] : memref<1x128xf32, #tpu.memory_space<vmem>>, vector<1x128xf32>
    %5 = vector.broadcast %4 : vector<1x128xf32> to vector<128x128xf32>
    %6 = arith.addf %3, %5 : vector<128x128xf32>
    %cst_5 = arith.constant 0.000000e+00 : f32
    %7 = vector.broadcast %cst_5 : f32 to vector<128x128xf32>
    %8 = arith.maximumf %6, %7 : vector<128x128xf32>
    %9 = arith.truncf %8 : vector<128x128xf32> to vector<128x128xbf16>
    %c0_6 = arith.constant 0 : index
    %c0_7 = arith.constant 0 : index
    %10 = vector.load %arg4[%c0_6, %c0_7] : memref<128x128xbf16, #tpu.memory_space<vmem>>, vector<128x128xbf16>
    %cst_8 = arith.constant dense<0.000000e+00> : vector<128x128xf32>
    %11 = tpu.matmul %9, %10, %cst_8 {dimension_numbers = #tpu.dot_dimension_numbers<[1], [0], [0], [1], [0, 0, 1, 1], [], []>} : vector<128x128xbf16>, vector<128x128xbf16>, vector<128x128xf32> -> vector<128x128xf32>
    %c0_9 = arith.constant 0 : index
    %c0_10 = arith.constant 0 : index
    %12 = vector.load %arg5[%c0_9, %c0_10] : memref<1x128xf32, #tpu.memory_space<vmem>>, vector<1x128xf32>
    %13 = vector.broadcast %12 : vector<1x128xf32> to vector<128x128xf32>
    %14 = arith.addf %11, %13 : vector<128x128xf32>
    %cst_11 = arith.constant 0.000000e+00 : f32
    %15 = vector.broadcast %cst_11 : f32 to vector<128x128xf32>
    %16 = arith.maximumf %14, %15 : vector<128x128xf32>
    %17 = arith.truncf %16 : vector<128x128xf32> to vector<128x128xbf16>
    %c0_12 = arith.constant 0 : index
    %c0_13 = arith.constant 0 : index
    %18 = vector.load %arg6[%c0_12, %c0_13] : memref<128x128xbf16, #tpu.memory_space<vmem>>, vector<128x128xbf16>
    %cst_14 = arith.constant dense<0.000000e+00> : vector<128x128xf32>
    %19 = tpu.matmul %17, %18, %cst_14 {dimension_numbers = #tpu.dot_dimension_numbers<[1], [0], [0], [1], [0, 0, 1, 1], [], []>} : vector<128x128xbf16>, vector<128x128xbf16>, vector<128x128xf32> -> vector<128x128xf32>
    %c0_15 = arith.constant 0 : index
    %c0_16 = arith.constant 0 : index
    %20 = vector.load %arg7[%c0_15, %c0_16] : memref<1x128xf32, #tpu.memory_space<vmem>>, vector<1x128xf32>
    %21 = vector.broadcast %20 : vector<1x128xf32> to vector<128x128xf32>
    %22 = arith.addf %19, %21 : vector<128x128xf32>
    %cst_17 = arith.constant 0.000000e+00 : f32
    %23 = vector.broadcast %cst_17 : f32 to vector<128x128xf32>
    %24 = arith.maximumf %22, %23 : vector<128x128xf32>
    %c0_18 = arith.constant 0 : index
    %c0_19 = arith.constant 0 : index
    %25 = vector.load %arg8[%c0_18, %c0_19] : memref<8x128xf32, #tpu.memory_space<vmem>>, vector<8x128xf32>
    %cst_20 = arith.constant dense<0.000000e+00> : vector<8x128xf32>
    %26 = tpu.matmul %25, %24, %cst_20 {dimension_numbers = #tpu.dot_dimension_numbers<[1], [1], [0], [0], [0, 0, 1, 0], [], []>} : vector<8x128xf32>, vector<128x128xf32>, vector<8x128xf32> -> vector<8x128xf32>
    %27 = vector.extract_strided_slice %26 {offsets = [0, 0], sizes = [1, 128], strides = [1, 1]} : vector<8x128xf32> to vector<1x128xf32>
    %c0_21 = arith.constant 0 : index
    %c0_22 = arith.constant 0 : index
    %28 = vector.load %arg9[%c0_21, %c0_22] : memref<8x1xf32, #tpu.memory_space<vmem>>, vector<1x1xf32>
    %29 = vector.broadcast %28 : vector<1x1xf32> to vector<1x128xf32>
    %30 = arith.addf %27, %29 : vector<1x128xf32>
    %c0_23 = arith.constant 0 : index
    %c0_24 = arith.constant 0 : index
    %31 = vector.load %arg10[%c0_23, %c0_24] : memref<1x128xf32, #tpu.memory_space<vmem>>, vector<1x128xf32>
    tpu.vector_store %arg10[%c0_23, %c0_24], %30 {strides = array<i32>} : memref<1x128xf32, #tpu.memory_space<vmem>>, vector<1x128xf32>,
    return
  }
  func.func @transform_0(%arg0: i32) -> (i32, i32) {
    %c0_i32 = arith.constant 0 : i32
    %c0_i32_0 = arith.constant 0 : i32
    return %arg0, %c0_i32 : i32, i32
  }
  func.func @transform_1(%arg0: i32) -> (i32, i32) {
    %c0_i32 = arith.constant 0 : i32
    %c0_i32_0 = arith.constant 0 : i32
    %c0_i32_1 = arith.constant 0 : i32
    return %c0_i32, %c0_i32_0 : i32, i32
  }
  func.func @transform_2(%arg0: i32) -> (i32, i32) {
    %c0_i32 = arith.constant 0 : i32
    %c0_i32_0 = arith.constant 0 : i32
    %c0_i32_1 = arith.constant 0 : i32
    return %c0_i32, %c0_i32_0 : i32, i32
  }
  func.func @transform_3(%arg0: i32) -> (i32, i32) {
    %c0_i32 = arith.constant 0 : i32
    %c0_i32_0 = arith.constant 0 : i32
    %c0_i32_1 = arith.constant 0 : i32
    return %c0_i32, %c0_i32_0 : i32, i32
  }
  func.func @transform_4(%arg0: i32) -> (i32, i32) {
    %c0_i32 = arith.constant 0 : i32
    %c0_i32_0 = arith.constant 0 : i32
    %c0_i32_1 = arith.constant 0 : i32
    return %c0_i32, %c0_i32_0 : i32, i32
  }
  func.func @transform_5(%arg0: i32) -> (i32, i32) {
    %c0_i32 = arith.constant 0 : i32
    %c0_i32_0 = arith.constant 0 : i32
    %c0_i32_1 = arith.constant 0 : i32
    return %c0_i32, %c0_i32_0 : i32, i32
  }
  func.func @transform_6(%arg0: i32) -> (i32, i32) {
    %c0_i32 = arith.constant 0 : i32
    %c0_i32_0 = arith.constant 0 : i32
    %c0_i32_1 = arith.constant 0 : i32
    return %c0_i32, %c0_i32_0 : i32, i32
  }
  func.func @transform_7(%arg0: i32) -> (i32, i32) {
    %c0_i32 = arith.constant 0 : i32
    %c0_i32_0 = arith.constant 0 : i32
    %c0_i32_1 = arith.constant 0 : i32
    return %c0_i32, %c0_i32_0 : i32, i32
  }
  func.func @transform_8(%arg0: i32) -> (i32, i32) {
    %c0_i32 = arith.constant 0 : i32
    %c0_i32_0 = arith.constant 0 : i32
    %c0_i32_1 = arith.constant 0 : i32
    return %c0_i32, %c0_i32_0 : i32, i32
  }
  func.func @transform_9(%arg0: i32) -> (i32, i32) {
    %c0_i32 = arith.constant 0 : i32
    %c0_i32_0 = arith.constant 0 : i32
    return %c0_i32, %arg0 : i32, i32
  }
}

</mosaic_0001>

<llo_original>
// kernel: neural_net_forward.1
$region0: #{neural_net_forward.1}
  #allocation0 [shape = 'u32[]', space=smem, size = 0x4, offset = 0x4, fixed_abs, tag = 'smem constant byte address 0x4 - core index']
  #allocation1 [shape = 'u32[144,128]{1,0:T(1,128)}', space=vmem, size = 0x12000, scoped, tag = 'internal scratch']
  %s0 = inlined_call_operand.vmem [shape: f32[128,8], index: 0, kind: input, shape index: {}]
  %s1 = inlined_call_operand.vmem [shape: bf16[8,128], index: 1, kind: input, shape index: {}]
  %s2 = inlined_call_operand.vmem [shape: f32[1,128], index: 2, kind: input, shape index: {}]
  %s3 = inlined_call_operand.vmem [shape: bf16[128,128], index: 3, kind: input, shape index: {}]
  %s4 = inlined_call_operand.vmem [shape: f32[1,128], index: 4, kind: input, shape index: {}]
  %s5 = inlined_call_operand.vmem [shape: bf16[128,128], index: 5, kind: input, shape index: {}]
  %s6 = inlined_call_operand.vmem [shape: f32[1,128], index: 6, kind: input, shape index: {}]
  %s7 = inlined_call_operand.vmem [shape: f32[8,128], index: 7, kind: input, shape index: {}]
  %s8 = inlined_call_operand.vmem [shape: f32[8,1], index: 8, kind: input, shape index: {}]
  %s9 = inlined_call_operand.vmem [shape: f32[1,128], index: 9, kind: output, shape index: {}]
  %s10 = sld [smem:[#allocation0]]
  $region46: #{neural_net_forward.1} parent=0
    _
  %s12 = ssub.s32 1, %s10
  %s13 = scalar_select 0, %s12, %s10
  // Predicated region
  $region2: #{neural_net_forward.1} parent=0 // pred_check
    _
  $region3: #{neural_net_forward.1} parent=0 // pred_check_branch
    %15 = sbr.rel (0) target = $region5
  $region4: #{neural_net_forward.1} parent=0 // pred_region
    _
  $region5: #{neural_net_forward.1} parent=0 // pred_fallthru
    _
  // Predicated region
  $region6: #{neural_net_forward.1} parent=0 // pred_check
    _
  $region7: #{neural_net_forward.1} parent=0 // pred_check_branch
    %17 = sbr.rel (0) target = $region9
  $region8: #{neural_net_forward.1} parent=0 // pred_region
    _
  $region9: #{neural_net_forward.1} parent=0 // pred_fallthru
    _
  // Predicated region
  $region10: #{neural_net_forward.1} parent=0 // pred_check
    _
  $region11: #{neural_net_forward.1} parent=0 // pred_check_branch
    %19 = sbr.rel (0) target = $region13
  $region12: #{neural_net_forward.1} parent=0 // pred_region
    _
  $region13: #{neural_net_forward.1} parent=0 // pred_fallthru
    _
  // Predicated region
  $region14: #{neural_net_forward.1} parent=0 // pred_check
    _
  $region15: #{neural_net_forward.1} parent=0 // pred_check_branch
    %21 = sbr.rel (0) target = $region17
  $region16: #{neural_net_forward.1} parent=0 // pred_region
    _
  $region17: #{neural_net_forward.1} parent=0 // pred_fallthru
    _
  // Predicated region
  $region18: #{neural_net_forward.1} parent=0 // pred_check
    _
  $region19: #{neural_net_forward.1} parent=0 // pred_check_branch
    %23 = sbr.rel (0) target = $region21
  $region20: #{neural_net_forward.1} parent=0 // pred_region
    _
  $region21: #{neural_net_forward.1} parent=0 // pred_fallthru
    _
  // Predicated region
  $region22: #{neural_net_forward.1} parent=0 // pred_check
    _
  $region23: #{neural_net_forward.1} parent=0 // pred_check_branch
    %25 = sbr.rel (0) target = $region25
  $region24: #{neural_net_forward.1} parent=0 // pred_region
    _
  $region25: #{neural_net_forward.1} parent=0 // pred_fallthru
    _
  // Predicated region
  $region26: #{neural_net_forward.1} parent=0 // pred_check
    _
  $region27: #{neural_net_forward.1} parent=0 // pred_check_branch
    %27 = sbr.rel (0) target = $region29
  $region28: #{neural_net_forward.1} parent=0 // pred_region
    _
  $region29: #{neural_net_forward.1} parent=0 // pred_fallthru
    _
  // Predicated region
  $region30: #{neural_net_forward.1} parent=0 // pred_check
    _
  $region31: #{neural_net_forward.1} parent=0 // pred_check_branch
    %29 = sbr.rel (0) target = $region33
  $region32: #{neural_net_forward.1} parent=0 // pred_region
    _
  $region33: #{neural_net_forward.1} parent=0 // pred_fallthru
    _
  // Predicated region
  $region34: #{neural_net_forward.1} parent=0 // pred_check
    _
  $region35: #{neural_net_forward.1} parent=0 // pred_check_branch
    %31 = sbr.rel (0) target = $region37
  $region36: #{neural_net_forward.1} parent=0 // pred_region
    _
  $region37: #{neural_net_forward.1} parent=0 // pred_fallthru
    _
  %v33 = vld [vmem:[%s0] sm:$0xff]
  %v34 = vld [vmem:[%s0 + $0x8] sm:$0xff]
  %v35 = vld [vmem:[%s0 + $0x10] sm:$0xff]
  %v36 = vld [vmem:[%s0 + $0x18] sm:$0xff]
  %v37 = vld [vmem:[%s0 + $0x20] sm:$0xff]
  %v38 = vld [vmem:[%s0 + $0x28] sm:$0xff]
  %v39 = vld [vmem:[%s0 + $0x30] sm:$0xff]
  %v40 = vld [vmem:[%s0 + $0x38] sm:$0xff]
  %v41 = vld [vmem:[%s0 + $0x40] sm:$0xff]
  %v42 = vld [vmem:[%s0 + $0x48] sm:$0xff]
  %v43 = vld [vmem:[%s0 + $0x50] sm:$0xff]
  %v44 = vld [vmem:[%s0 + $0x58] sm:$0xff]
  %v45 = vld [vmem:[%s0 + $0x60] sm:$0xff]
  %v46 = vld [vmem:[%s0 + $0x68] sm:$0xff]
  %v47 = vld [vmem:[%s0 + $0x70] sm:$0xff]
  %v48 = vld [vmem:[%s0 + $0x78] sm:$0xff]
  %v49 = vpack.c.bf16 %v34, %v33
  %v50 = vpack.c.bf16 %v36, %v35
  %v51 = vpack.c.bf16 %v38, %v37
  %v52 = vpack.c.bf16 %v40, %v39
  %v53 = vpack.c.bf16 %v42, %v41
  %v54 = vpack.c.bf16 %v44, %v43
  %v55 = vpack.c.bf16 %v46, %v45
  %v56 = vpack.c.bf16 %v48, %v47
  %v57 = vld [vmem:[%s1] sm:$0xf]
  %v58 = vld [vmem:[%s2] sm:$0x1]
  %v60 = vlaneseq
  %v61 = vshrl.u32 %v60, 7
  %v62 = vsub.s32 0, %v61
  %v63 = vrot.slane %v58, %v62
  %vm65 = vcmask 64512
  %v67 = vsel %vm65, %v49, 0
  %v70 = vsel %vm65, %v50, 0
  %v73 = vsel %vm65, %v51, 0
  %v76 = vsel %vm65, %v52, 0
  %v79 = vsel %vm65, %v53, 0
  %v82 = vsel %vm65, %v54, 0
  %v85 = vsel %vm65, %v55, 0
  %v88 = vsel %vm65, %v56, 0
  %vm90 = vcmask 1043456
  %v92 = vsel %vm90, %v57, 0
  %94 = vmatprep.subr.bf16.mxu0 0
  %95 = vmatpush1.bf16.msra.mxu0 %v92
  %96 = vmatprep.subr.bf16.mxu0 0
  %97 = vmatpush1.bf16.msra.mxu0 0
  %98 = vmatprep.subr.bf16.mxu0 0
  %99 = vmatpush1.bf16.msra.mxu0 0
  %100 = vmatprep.subr.bf16.mxu0 0
  %101 = vmatpush1.bf16.msra.mxu0 0
  %102 = vmatprep.subr.bf16.mxu0 0
  %103 = vmatpush1.bf16.msra.mxu0 0
  %104 = vmatprep.subr.bf16.mxu0 0
  %105 = vmatpush1.bf16.msra.mxu0 0
  %106 = vmatprep.subr.bf16.mxu0 0
  %107 = vmatpush1.bf16.msra.mxu0 0
  %108 = vmatprep.subr.bf16.mxu0 0
  %109 = vmatpush1.bf16.msra.mxu0 0
  %110 = vmatprep.subr.bf16.mxu0 0
  %111 = vmatpush1.bf16.msra.mxu0 0
  %112 = vmatprep.subr.bf16.mxu0 0
  %113 = vmatpush1.bf16.msra.mxu0 0
  %114 = vmatprep.subr.bf16.mxu0 0
  %115 = vmatpush1.bf16.msra.mxu0 0
  %116 = vmatprep.subr.bf16.mxu0 0
  %117 = vmatpush1.bf16.msra.mxu0 0
  %118 = vmatprep.subr.bf16.mxu0 0
  %119 = vmatpush1.bf16.msra.mxu0 0
  %120 = vmatprep.subr.bf16.mxu0 0
  %121 = vmatpush1.bf16.msra.mxu0 0
  %122 = vmatprep.subr.bf16.mxu0 0
  %123 = vmatpush1.bf16.msra.mxu0 0
  %124 = vmatprep.subr.bf16.mxu0 0
  %125 = vmatpush1.bf16.msra.mxu0 0
  %126 = vmatprep.mubr.bf16.mxu0 0
  %127 = vmatmul.mubr.bf16.gmra.mrb[0].mxu0 %v67
  %v128 = vpop.f32.mrb[0].mxu0
  %v129 = vadd.f32 %v63, %v128
  %v130 = vpop.f32.mrb[0].mxu0
  %v131 = vpop.f32.mrb[0].mxu0
  %v132 = vadd.f32 %v63, %v131
  %v133 = vpop.f32.mrb[0].mxu0
  %134 = vmatprep.mubr.bf16.mxu0 0
  %135 = vmatmul.mubr.bf16.gmra.mrb[0].mxu0 %v70
  %v136 = vpop.f32.mrb[0].mxu0
  %v137 = vadd.f32 %v63, %v136
  %v138 = vpop.f32.mrb[0].mxu0
  %v139 = vpop.f32.mrb[0].mxu0
  %v140 = vadd.f32 %v63, %v139
  %v141 = vpop.f32.mrb[0].mxu0
  %142 = vmatprep.mubr.bf16.mxu0 0
  %143 = vmatmul.mubr.bf16.gmra.mrb[0].mxu0 %v73
  %v144 = vpop.f32.mrb[0].mxu0
  %v145 = vadd.f32 %v63, %v144
  %v146 = vpop.f32.mrb[0].mxu0
  %v147 = vpop.f32.mrb[0].mxu0
  %v148 = vadd.f32 %v63, %v147
  %v149 = vpop.f32.mrb[0].mxu0
  %150 = vmatprep.mubr.bf16.mxu0 0
  %151 = vmatmul.mubr.bf16.gmra.mrb[0].mxu0 %v76
  %v152 = vpop.f32.mrb[0].mxu0
  %v153 = vadd.f32 %v63, %v152
  %v154 = vpop.f32.mrb[0].mxu0
  %v155 = vpop.f32.mrb[0].mxu0
  %v156 = vadd.f32 %v63, %v155
  %v157 = vpop.f32.mrb[0].mxu0
  %158 = vmatprep.mubr.bf16.mxu0 0
  %159 = vmatmul.mubr.bf16.gmra.mrb[0].mxu0 %v79
  %v160 = vpop.f32.mrb[0].mxu0
  %v161 = vadd.f32 %v63, %v160
  %v162 = vpop.f32.mrb[0].mxu0
  %v163 = vpop.f32.mrb[0].mxu0
  %v164 = vadd.f32 %v63, %v163
  %v165 = vpop.f32.mrb[0].mxu0
  %166 = vmatprep.mubr.bf16.mxu0 0
  %167 = vmatmul.mubr.bf16.gmra.mrb[0].mxu0 %v82
  %v168 = vpop.f32.mrb[0].mxu0
  %v169 = vadd.f32 %v63, %v168
  %v170 = vpop.f32.mrb[0].mxu0
  %v171 = vpop.f32.mrb[0].mxu0
  %v172 = vadd.f32 %v63, %v171
  %v173 = vpop.f32.mrb[0].mxu0
  %174 = vmatprep.mubr.bf16.mxu0 0
  %175 = vmatmul.mubr.bf16.gmra.mrb[0].mxu0 %v85
  %v176 = vpop.f32.mrb[0].mxu0
  %v177 = vadd.f32 %v63, %v176
  %v178 = vpop.f32.mrb[0].mxu0
  %v179 = vpop.f32.mrb[0].mxu0
  %v180 = vadd.f32 %v63, %v179
  %v181 = vpop.f32.mrb[0].mxu0
  %182 = vmatprep.mubr.bf16.mxu0 0
  %183 = vmatmul.mubr.bf16.gmra.mrb[0].mxu0 %v88
  %v184 = vpop.f32.mrb[0].mxu0
  %v185 = vadd.f32 %v63, %v184
  %v186 = vpop.f32.mrb[0].mxu0
  %v187 = vpop.f32.mrb[0].mxu0
  %v188 = vadd.f32 %v63, %v187
  %v189 = vpop.f32.mrb[0].mxu0
  %190 = vdwg.mxu0
  %v191 = vmax.f32 %v129, 0.0
  %v192 = vmax.f32 %v132, 0.0
  %v193 = vmax.f32 %v137, 0.0
  %v194 = vmax.f32 %v140, 0.0
  %v195 = vmax.f32 %v145, 0.0
  %v196 = vmax.f32 %v148, 0.0
  %v197 = vmax.f32 %v153, 0.0
  %v198 = vmax.f32 %v156, 0.0
  %v199 = vmax.f32 %v161, 0.0
  %v200 = vmax.f32 %v164, 0.0
  %v201 = vmax.f32 %v169, 0.0
  %v202 = vmax.f32 %v172, 0.0
  %v203 = vmax.f32 %v177, 0.0
  %v204 = vmax.f32 %v180, 0.0
  %v205 = vmax.f32 %v185, 0.0
  %v206 = vmax.f32 %v188, 0.0
  %v207 = vpack.c.bf16 %v192, %v191
  %v208 = vpack.c.bf16 %v194, %v193
  %v209 = vpack.c.bf16 %v196, %v195
  %v210 = vpack.c.bf16 %v198, %v197
  %v211 = vpack.c.bf16 %v200, %v199
  %v212 = vpack.c.bf16 %v202, %v201
  %v213 = vpack.c.bf16 %v204, %v203
  %v214 = vpack.c.bf16 %v206, %v205
  %v215 = vld [vmem:[%s3] sm:$0xf]
  %v216 = vld [vmem:[%s3 + $0x4] sm:$0xf]
  %v217 = vld [vmem:[%s3 + $0x8] sm:$0xf]
  %v218 = vld [vmem:[%s3 + $0xc] sm:$0xf]
  %v219 = vld [vmem:[%s3 + $0x10] sm:$0xf]
  %v220 = vld [vmem:[%s3 + $0x14] sm:$0xf]
  %v221 = vld [vmem:[%s3 + $0x18] sm:$0xf]
  %v222 = vld [vmem:[%s3 + $0x1c] sm:$0xf]
  %v223 = vld [vmem:[%s3 + $0x20] sm:$0xf]
  %v224 = vld [vmem:[%s3 + $0x24] sm:$0xf]
  %v225 = vld [vmem:[%s3 + $0x28] sm:$0xf]
  %v226 = vld [vmem:[%s3 + $0x2c] sm:$0xf]
  %v227 = vld [vmem:[%s3 + $0x30] sm:$0xf]
  %v228 = vld [vmem:[%s3 + $0x34] sm:$0xf]
  %v229 = vld [vmem:[%s3 + $0x38] sm:$0xf]
  %v230 = vld [vmem:[%s3 + $0x3c] sm:$0xf]
  %v231 = vld [vmem:[%s4] sm:$0x1]
  %v233 = vlaneseq
  %v234 = vshrl.u32 %v233, 7
  %v235 = vsub.s32 0, %v234
  %v236 = vrot.slane %v231, %v235
  %v254 = vunpack.c.l.b16 %v215
  %v255 = vunpack.c.l.b16 %v216
  %v256 = vunpack.c.l.b16 %v217
  %v257 = vunpack.c.l.b16 %v218
  %v258 = vunpack.c.l.b16 %v219
  %v259 = vunpack.c.l.b16 %v220
  %v260 = vunpack.c.l.b16 %v221
  %v261 = vunpack.c.l.b16 %v222
  %v262 = vunpack.c.l.b16 %v223
  %v263 = vunpack.c.l.b16 %v224
  %v264 = vunpack.c.l.b16 %v225
  %v265 = vunpack.c.l.b16 %v226
  %v266 = vunpack.c.l.b16 %v227
  %v267 = vunpack.c.l.b16 %v228
  %v268 = vunpack.c.l.b16 %v229
  %v269 = vunpack.c.l.b16 %v230
  %v270 = vpack.c.b16 %v255, %v254
  %v271 = vpack.c.b16 %v257, %v256
  %v272 = vpack.c.b16 %v259, %v258
  %v273 = vpack.c.b16 %v261, %v260
  %v274 = vpack.c.b16 %v263, %v262
  %v275 = vpack.c.b16 %v265, %v264
  %v276 = vpack.c.b16 %v267, %v266
  %v277 = vpack.c.b16 %v269, %v268
  %286 = vmatprep.subr.bf16.mxu0 0
  %287 = vmatpush1.bf16.msra.mxu0 %v270
  %288 = vmatprep.subr.bf16.mxu0 0
  %289 = vmatpush1.bf16.msra.mxu0 %v271
  %290 = vmatprep.subr.bf16.mxu0 0
  %291 = vmatpush1.bf16.msra.mxu0 %v272
  %292 = vmatprep.subr.bf16.mxu0 0
  %293 = vmatpush1.bf16.msra.mxu0 %v273
  %294 = vmatprep.subr.bf16.mxu0 0
  %295 = vmatpush1.bf16.msra.mxu0 %v274
  %296 = vmatprep.subr.bf16.mxu0 0
  %297 = vmatpush1.bf16.msra.mxu0 %v275
  %298 = vmatprep.subr.bf16.mxu0 0
  %299 = vmatpush1.bf16.msra.mxu0 %v276
  %300 = vmatprep.subr.bf16.mxu0 0
  %301 = vmatpush1.bf16.msra.mxu0 %v277
  %302 = vmatprep.subr.bf16.mxu0 0
  %303 = vmatpush1.bf16.msra.mxu0 0
  %304 = vmatprep.subr.bf16.mxu0 0
  %305 = vmatpush1.bf16.msra.mxu0 0
  %306 = vmatprep.subr.bf16.mxu0 0
  %307 = vmatpush1.bf16.msra.mxu0 0
  %308 = vmatprep.subr.bf16.mxu0 0
  %309 = vmatpush1.bf16.msra.mxu0 0
  %310 = vmatprep.subr.bf16.mxu0 0
  %311 = vmatpush1.bf16.msra.mxu0 0
  %312 = vmatprep.subr.bf16.mxu0 0
  %313 = vmatpush1.bf16.msra.mxu0 0
  %314 = vmatprep.subr.bf16.mxu0 0
  %315 = vmatpush1.bf16.msra.mxu0 0
  %316 = vmatprep.subr.bf16.mxu0 0
  %317 = vmatpush1.bf16.msra.mxu0 0
  %318 = vmatprep.mubr.bf16.mxu0 0
  %319 = vmatmul.mubr.bf16.gmra.mrb[0].mxu0 %v207
  %v320 = vpop.f32.mrb[0].mxu0
  %v321 = vadd.f32 %v236, %v320
  %v322 = vpop.f32.mrb[0].mxu0
  %v323 = vpop.f32.mrb[0].mxu0
  %v324 = vadd.f32 %v236, %v323
  %v325 = vpop.f32.mrb[0].mxu0
  %326 = vmatprep.mubr.bf16.mxu0 0
  %327 = vmatmul.mubr.bf16.gmra.mrb[0].mxu0 %v208
  %v328 = vpop.f32.mrb[0].mxu0
  %v329 = vadd.f32 %v236, %v328
  %v330 = vpop.f32.mrb[0].mxu0
  %v331 = vpop.f32.mrb[0].mxu0
  %v332 = vadd.f32 %v236, %v331
  %v333 = vpop.f32.mrb[0].mxu0
  %334 = vmatprep.mubr.bf16.mxu0 0
  %335 = vmatmul.mubr.bf16.gmra.mrb[0].mxu0 %v209
  %v336 = vpop.f32.mrb[0].mxu0
  %v337 = vadd.f32 %v236, %v336
  %v338 = vpop.f32.mrb[0].mxu0
  %v339 = vpop.f32.mrb[0].mxu0
  %v340 = vadd.f32 %v236, %v339
  %v341 = vpop.f32.mrb[0].mxu0
  %342 = vmatprep.mubr.bf16.mxu0 0
  %343 = vmatmul.mubr.bf16.gmra.mrb[0].mxu0 %v210
  %v344 = vpop.f32.mrb[0].mxu0
  %v345 = vadd.f32 %v236, %v344
  %v346 = vpop.f32.mrb[0].mxu0
  %v347 = vpop.f32.mrb[0].mxu0
  %v348 = vadd.f32 %v236, %v347
  %v349 = vpop.f32.mrb[0].mxu0
  %350 = vmatprep.mubr.bf16.mxu0 0
  %351 = vmatmul.mubr.bf16.gmra.mrb[0].mxu0 %v211
  %v352 = vpop.f32.mrb[0].mxu0
  %v353 = vadd.f32 %v236, %v352
  %v354 = vpop.f32.mrb[0].mxu0
  %v355 = vpop.f32.mrb[0].mxu0
  %v356 = vadd.f32 %v236, %v355
  %v357 = vpop.f32.mrb[0].mxu0
  %358 = vmatprep.mubr.bf16.mxu0 0
  %359 = vmatmul.mubr.bf16.gmra.mrb[0].mxu0 %v212
  %v360 = vpop.f32.mrb[0].mxu0
  %v361 = vadd.f32 %v236, %v360
  %v362 = vpop.f32.mrb[0].mxu0
  %v363 = vpop.f32.mrb[0].mxu0
  %v364 = vadd.f32 %v236, %v363
  %v365 = vpop.f32.mrb[0].mxu0
  %366 = vmatprep.mubr.bf16.mxu0 0
  %367 = vmatmul.mubr.bf16.gmra.mrb[0].mxu0 %v213
  %v368 = vpop.f32.mrb[0].mxu0
  %v369 = vadd.f32 %v236, %v368
  %v370 = vpop.f32.mrb[0].mxu0
  %v371 = vpop.f32.mrb[0].mxu0
  %v372 = vadd.f32 %v236, %v371
  %v373 = vpop.f32.mrb[0].mxu0
  %374 = vmatprep.mubr.bf16.mxu0 0
  %375 = vmatmul.mubr.bf16.gmra.mrb[0].mxu0 %v214
  %v376 = vpop.f32.mrb[0].mxu0
  %v377 = vadd.f32 %v236, %v376
  %v378 = vpop.f32.mrb[0].mxu0
  %v379 = vpop.f32.mrb[0].mxu0
  %v380 = vadd.f32 %v236, %v379
  %v381 = vpop.f32.mrb[0].mxu0
  %382 = vdwg.mxu0
  %v383 = vmax.f32 %v321, 0.0
  %v384 = vmax.f32 %v324, 0.0
  %v385 = vmax.f32 %v329, 0.0
  %v386 = vmax.f32 %v332, 0.0
  %v387 = vmax.f32 %v337, 0.0
  %v388 = vmax.f32 %v340, 0.0
  %v389 = vmax.f32 %v345, 0.0
  %v390 = vmax.f32 %v348, 0.0
  %v391 = vmax.f32 %v353, 0.0
  %v392 = vmax.f32 %v356, 0.0
  %v393 = vmax.f32 %v361, 0.0
  %v394 = vmax.f32 %v364, 0.0
  %v395 = vmax.f32 %v369, 0.0
  %v396 = vmax.f32 %v372, 0.0
  %v397 = vmax.f32 %v377, 0.0
  %v398 = vmax.f32 %v380, 0.0
  %v399 = vpack.c.bf16 %v384, %v383
  %v400 = vpack.c.bf16 %v386, %v385
  %v401 = vpack.c.bf16 %v388, %v387
  %v402 = vpack.c.bf16 %v390, %v389
  %v403 = vpack.c.bf16 %v392, %v391
  %v404 = vpack.c.bf16 %v394, %v393
  %v405 = vpack.c.bf16 %v396, %v395
  %v406 = vpack.c.bf16 %v398, %v397
  %v407 = vld [vmem:[%s5] sm:$0xf]
  %v408 = vld [vmem:[%s5 + $0x4] sm:$0xf]
  %v409 = vld [vmem:[%s5 + $0x8] sm:$0xf]
  %v410 = vld [vmem:[%s5 + $0xc] sm:$0xf]
  %v411 = vld [vmem:[%s5 + $0x10] sm:$0xf]
  %v412 = vld [vmem:[%s5 + $0x14] sm:$0xf]
  %v413 = vld [vmem:[%s5 + $0x18] sm:$0xf]
  %v414 = vld [vmem:[%s5 + $0x1c] sm:$0xf]
  %v415 = vld [vmem:[%s5 + $0x20] sm:$0xf]
  %v416 = vld [vmem:[%s5 + $0x24] sm:$0xf]
  %v417 = vld [vmem:[%s5 + $0x28] sm:$0xf]
  %v418 = vld [vmem:[%s5 + $0x2c] sm:$0xf]
  %v419 = vld [vmem:[%s5 + $0x30] sm:$0xf]
  %v420 = vld [vmem:[%s5 + $0x34] sm:$0xf]
  %v421 = vld [vmem:[%s5 + $0x38] sm:$0xf]
  %v422 = vld [vmem:[%s5 + $0x3c] sm:$0xf]
  %v423 = vld [vmem:[%s6] sm:$0x1]
  %v425 = vlaneseq
  %v426 = vshrl.u32 %v425, 7
  %v427 = vsub.s32 0, %v426
  %v428 = vrot.slane %v423, %v427
  %v446 = vunpack.c.l.b16 %v407
  %v447 = vunpack.c.l.b16 %v408
  %v448 = vunpack.c.l.b16 %v409
  %v449 = vunpack.c.l.b16 %v410
  %v450 = vunpack.c.l.b16 %v411
  %v451 = vunpack.c.l.b16 %v412
  %v452 = vunpack.c.l.b16 %v413
  %v453 = vunpack.c.l.b16 %v414
  %v454 = vunpack.c.l.b16 %v415
  %v455 = vunpack.c.l.b16 %v416
  %v456 = vunpack.c.l.b16 %v417
  %v457 = vunpack.c.l.b16 %v418
  %v458 = vunpack.c.l.b16 %v419
  %v459 = vunpack.c.l.b16 %v420
  %v460 = vunpack.c.l.b16 %v421
  %v461 = vunpack.c.l.b16 %v422
  %v462 = vpack.c.b16 %v447, %v446
  %v463 = vpack.c.b16 %v449, %v448
  %v464 = vpack.c.b16 %v451, %v450
  %v465 = vpack.c.b16 %v453, %v452
  %v466 = vpack.c.b16 %v455, %v454
  %v467 = vpack.c.b16 %v457, %v456
  %v468 = vpack.c.b16 %v459, %v458
  %v469 = vpack.c.b16 %v461, %v460
  %478 = vmatprep.subr.bf16.mxu0 0
  %479 = vmatpush1.bf16.msra.mxu0 %v462
  %480 = vmatprep.subr.bf16.mxu0 0
  %481 = vmatpush1.bf16.msra.mxu0 %v463
  %482 = vmatprep.subr.bf16.mxu0 0
  %483 = vmatpush1.bf16.msra.mxu0 %v464
  %484 = vmatprep.subr.bf16.mxu0 0
  %485 = vmatpush1.bf16.msra.mxu0 %v465
  %486 = vmatprep.subr.bf16.mxu0 0
  %487 = vmatpush1.bf16.msra.mxu0 %v466
  %488 = vmatprep.subr.bf16.mxu0 0
  %489 = vmatpush1.bf16.msra.mxu0 %v467
  %490 = vmatprep.subr.bf16.mxu0 0
  %491 = vmatpush1.bf16.msra.mxu0 %v468
  %492 = vmatprep.subr.bf16.mxu0 0
  %493 = vmatpush1.bf16.msra.mxu0 %v469
  %494 = vmatprep.subr.bf16.mxu0 0
  %495 = vmatpush1.bf16.msra.mxu0 0
  %496 = vmatprep.subr.bf16.mxu0 0
  %497 = vmatpush1.bf16.msra.mxu0 0
  %498 = vmatprep.subr.bf16.mxu0 0
  %499 = vmatpush1.bf16.msra.mxu0 0
  %500 = vmatprep.subr.bf16.mxu0 0
  %501 = vmatpush1.bf16.msra.mxu0 0
  %502 = vmatprep.subr.bf16.mxu0 0
  %503 = vmatpush1.bf16.msra.mxu0 0
  %504 = vmatprep.subr.bf16.mxu0 0
  %505 = vmatpush1.bf16.msra.mxu0 0
  %506 = vmatprep.subr.bf16.mxu0 0
  %507 = vmatpush1.bf16.msra.mxu0 0
  %508 = vmatprep.subr.bf16.mxu0 0
  %509 = vmatpush1.bf16.msra.mxu0 0
  %510 = vmatprep.mubr.bf16.mxu0 0
  %511 = vmatmul.mubr.bf16.gmra.mrb[0].mxu0 %v399
  %v512 = vpop.f32.mrb[0].mxu0
  %v513 = vadd.f32 %v428, %v512
  %v514 = vpop.f32.mrb[0].mxu0
  %v515 = vpop.f32.mrb[0].mxu0
  %v516 = vadd.f32 %v428, %v515
  %v517 = vpop.f32.mrb[0].mxu0
  %518 = vmatprep.mubr.bf16.mxu0 0
  %519 = vmatmul.mubr.bf16.gmra.mrb[0].mxu0 %v400
  %v520 = vpop.f32.mrb[0].mxu0
  %v521 = vadd.f32 %v428, %v520
  %v522 = vpop.f32.mrb[0].mxu0
  %v523 = vpop.f32.mrb[0].mxu0
  %v524 = vadd.f32 %v428, %v523
  %v525 = vpop.f32.mrb[0].mxu0
  %526 = vmatprep.mubr.bf16.mxu0 0
  %527 = vmatmul.mubr.bf16.gmra.mrb[0].mxu0 %v401
  %v528 = vpop.f32.mrb[0].mxu0
  %v529 = vadd.f32 %v428, %v528
  %v530 = vpop.f32.mrb[0].mxu0
  %v531 = vpop.f32.mrb[0].mxu0
  %v532 = vadd.f32 %v428, %v531
  %v533 = vpop.f32.mrb[0].mxu0
  %534 = vmatprep.mubr.bf16.mxu0 0
  %535 = vmatmul.mubr.bf16.gmra.mrb[0].mxu0 %v402
  %v536 = vpop.f32.mrb[0].mxu0
  %v537 = vadd.f32 %v428, %v536
  %v538 = vpop.f32.mrb[0].mxu0
  %v539 = vpop.f32.mrb[0].mxu0
  %v540 = vadd.f32 %v428, %v539
  %v541 = vpop.f32.mrb[0].mxu0
  %542 = vmatprep.mubr.bf16.mxu0 0
  %543 = vmatmul.mubr.bf16.gmra.mrb[0].mxu0 %v403
  %v544 = vpop.f32.mrb[0].mxu0
  %v545 = vadd.f32 %v428, %v544
  %v546 = vpop.f32.mrb[0].mxu0
  %v547 = vpop.f32.mrb[0].mxu0
  %v548 = vadd.f32 %v428, %v547
  %v549 = vpop.f32.mrb[0].mxu0
  %550 = vmatprep.mubr.bf16.mxu0 0
  %551 = vmatmul.mubr.bf16.gmra.mrb[0].mxu0 %v404
  %v552 = vpop.f32.mrb[0].mxu0
  %v553 = vadd.f32 %v428, %v552
  %v554 = vpop.f32.mrb[0].mxu0
  %v555 = vpop.f32.mrb[0].mxu0
  %v556 = vadd.f32 %v428, %v555
  %v557 = vpop.f32.mrb[0].mxu0
  %558 = vmatprep.mubr.bf16.mxu0 0
  %559 = vmatmul.mubr.bf16.gmra.mrb[0].mxu0 %v405
  %v560 = vpop.f32.mrb[0].mxu0
  %v561 = vadd.f32 %v428, %v560
  %v562 = vpop.f32.mrb[0].mxu0
  %v563 = vpop.f32.mrb[0].mxu0
  %v564 = vadd.f32 %v428, %v563
  %v565 = vpop.f32.mrb[0].mxu0
  %566 = vmatprep.mubr.bf16.mxu0 0
  %567 = vmatmul.mubr.bf16.gmra.mrb[0].mxu0 %v406
  %v568 = vpop.f32.mrb[0].mxu0
  %v569 = vadd.f32 %v428, %v568
  %v570 = vpop.f32.mrb[0].mxu0
  %v571 = vpop.f32.mrb[0].mxu0
  %v572 = vadd.f32 %v428, %v571
  %v573 = vpop.f32.mrb[0].mxu0
  %574 = vdwg.mxu0
  %v575 = vmax.f32 %v513, 0.0
  %v576 = vmax.f32 %v516, 0.0
  %v577 = vmax.f32 %v521, 0.0
  %v578 = vmax.f32 %v524, 0.0
  %v579 = vmax.f32 %v529, 0.0
  %v580 = vmax.f32 %v532, 0.0
  %v581 = vmax.f32 %v537, 0.0
  %v582 = vmax.f32 %v540, 0.0
  %v583 = vmax.f32 %v545, 0.0
  %v584 = vmax.f32 %v548, 0.0
  %v585 = vmax.f32 %v553, 0.0
  %v586 = vmax.f32 %v556, 0.0
  %v587 = vmax.f32 %v561, 0.0
  %v588 = vmax.f32 %v564, 0.0
  %v589 = vmax.f32 %v569, 0.0
  %v590 = vmax.f32 %v572, 0.0
  %v591 = vld [vmem:[%s7] sm:$0xff]
  %592 = vmatprep.subr.mxu0 0.0
  %593 = vmatpush1.xpose.msra.mxu0 %v575
  %594 = vmatprep.subr.mxu0 0.0
  %595 = vmatpush1.xpose.msra.mxu0 %v576
  %596 = vmatprep.subr.mxu0 0.0
  %597 = vmatpush1.xpose.msra.mxu0 %v577
  %598 = vmatprep.subr.mxu0 0.0
  %599 = vmatpush1.xpose.msra.mxu0 %v578
  %600 = vmatprep.subr.mxu0 0.0
  %601 = vmatpush1.xpose.msra.mxu0 %v579
  %602 = vmatprep.subr.mxu0 0.0
  %603 = vmatpush1.xpose.msra.mxu0 %v580
  %604 = vmatprep.subr.mxu0 0.0
  %605 = vmatpush1.xpose.msra.mxu0 %v581
  %606 = vmatprep.subr.mxu0 0.0
  %607 = vmatpush1.xpose.msra.mxu0 %v582
  %608 = vmatprep.subr.mxu0 0.0
  %609 = vmatpush1.xpose.msra.mxu0 %v583
  %610 = vmatprep.subr.mxu0 0.0
  %611 = vmatpush1.xpose.msra.mxu0 %v584
  %612 = vmatprep.subr.mxu0 0.0
  %613 = vmatpush1.xpose.msra.mxu0 %v585
  %614 = vmatprep.subr.mxu0 0.0
  %615 = vmatpush1.xpose.msra.mxu0 %v586
  %616 = vmatprep.subr.mxu0 0.0
  %617 = vmatpush1.xpose.msra.mxu0 %v587
  %618 = vmatprep.subr.mxu0 0.0
  %619 = vmatpush1.xpose.msra.mxu0 %v588
  %620 = vmatprep.subr.mxu0 0.0
  %621 = vmatpush1.xpose.msra.mxu0 %v589
  %622 = vmatprep.subr.mxu0 0.0
  %623 = vmatpush1.xpose.msra.mxu0 %v590
  %624 = vmatprep.subr.mxu0 0.0
  %625 = vmatpush1.xpose.msra.mxu0 0.0
  %626 = vmatprep.subr.mxu0 0.0
  %627 = vmatpush1.xpose.msra.mxu0 0.0
  %628 = vmatprep.subr.mxu0 0.0
  %629 = vmatpush1.xpose.msra.mxu0 0.0
  %630 = vmatprep.subr.mxu0 0.0
  %631 = vmatpush1.xpose.msra.mxu0 0.0
  %632 = vmatprep.subr.mxu0 0.0
  %633 = vmatpush1.xpose.msra.mxu0 0.0
  %634 = vmatprep.subr.mxu0 0.0
  %635 = vmatpush1.xpose.msra.mxu0 0.0
  %636 = vmatprep.subr.mxu0 0.0
  %637 = vmatpush1.xpose.msra.mxu0 0.0
  %638 = vmatprep.subr.mxu0 0.0
  %639 = vmatpush1.xpose.msra.mxu0 0.0
  %640 = vmatprep.subr.mxu0 0.0
  %641 = vmatpush1.xpose.msra.mxu0 0.0
  %642 = vmatprep.subr.mxu0 0.0
  %643 = vmatpush1.xpose.msra.mxu0 0.0
  %644 = vmatprep.subr.mxu0 0.0
  %645 = vmatpush1.xpose.msra.mxu0 0.0
  %646 = vmatprep.subr.mxu0 0.0
  %647 = vmatpush1.xpose.msra.mxu0 0.0
  %648 = vmatprep.subr.mxu0 0.0
  %649 = vmatpush1.xpose.msra.mxu0 0.0
  %650 = vmatprep.subr.mxu0 0.0
  %651 = vmatpush1.xpose.msra.mxu0 0.0
  %652 = vmatprep.subr.mxu0 0.0
  %653 = vmatpush1.xpose.msra.mxu0 0.0
  %654 = vmatprep.subr.mxu0 0.0
  %655 = vmatpush1.xpose.msra.mxu0 0.0
  %656 = vmatprep.mubr.f32.mxu0 0.0
  %657 = vmatmul.mubr.f32.gmra.mrb[0].mxu0 %v591
  %v658 = vpop.f32.mrb[0].mxu0
  %v659 = vadd.f32 0.0, %v658
  %v660 = vpop.f32.mrb[0].mxu0
  %661 = vdwg.mxu0
  %v662 = vld [vmem:[%s8] sm:$0x1]
  %664 = vset.pattern.permute.xlu0 0
  %665 = vperm.xlu0 %664, %v662
  %v666 = vpop.permute.xlu0 %665
  %v668 = vadd.f32 %v659, %v666
  %669 = vst [vmem:[%s9] sm:$0x1] %v668
  // Predicated region
  $region38: #{neural_net_forward.1} parent=0 // pred_check
    _
  $region39: #{neural_net_forward.1} parent=0 // pred_check_branch
    %671 = sbr.rel (0) target = $region41
  $region40: #{neural_net_forward.1} parent=0 // pred_region
    _
  $region41: #{neural_net_forward.1} parent=0 // pred_fallthru
    _
  // Predicated region
  $region42: #{neural_net_forward.1} parent=0 // pred_check
    _
  $region43: #{neural_net_forward.1} parent=0 // pred_check_branch
    %673 = sbr.rel (0) target = $region45
  $region44: #{neural_net_forward.1} parent=0 // pred_region
    _
  $region45: #{neural_net_forward.1} parent=0 // pred_fallthru
    _

</llo_original>
